<compile_context>
chip_gen: v7x
topology: tpu7x:2x2x1
jax: 0.10.0
libtpu: 0.0.40
codegen_flags: <defaults>
</compile_context>

<pallas_src>
import math

import jax
import jax.numpy as jnp
from jax.experimental import pallas as pl
from jax.experimental.pallas import tpu as pltpu


# --------------------------------------------------------------------------- #
# Kernel: pure lock-step VPU add (memory-bound; compute is free under the DMA)
# --------------------------------------------------------------------------- #
def _pe_add_kernel(x_ref, pe_ref, o_ref):
    # x_ref/o_ref: (1, TP, TC); pe_ref: (TP, TC) (f32). Add in promoted dtype,
    # narrow to the output dtype (PyTorch adds an f32 buffer and promotes).
    o_ref[...] = (x_ref[...] + pe_ref[...][None]).astype(o_ref.dtype)


# --------------------------------------------------------------------------- #
# Parameter setup (mirrors PyTorch __init__, float32) — done once at init.
# --------------------------------------------------------------------------- #
def make_pe_table(d_model: int, max_len: int = 512) -> jnp.ndarray:
    position = jnp.arange(0, max_len, dtype=jnp.float32)[:, None]          # (max_len, 1)
    div_term = jnp.exp(
        jnp.arange(0, d_model, 2, dtype=jnp.float32) * (-math.log(10000.0) / d_model)
    )                                                                       # (ceil(D/2),)
    angles = position * div_term                                            # (max_len, ceil(D/2))
    pe = jnp.zeros((max_len, d_model), dtype=jnp.float32)
    pe = pe.at[:, 0::2].set(jnp.sin(angles))
    pe = pe.at[:, 1::2].set(jnp.cos(angles[:, : d_model // 2]))             # odd-D safe
    return pe                                                               # (max_len, d_model)


# --------------------------------------------------------------------------- #
# Tiling heuristics (static Python, evaluated at trace time)
# --------------------------------------------------------------------------- #
def _sublane(dtype) -> int:
    # Dtype-aware sublane multiple: 8 (f32), 16 (bf16), 32 (int8/fp8).
    return max(8, 32 // jnp.dtype(dtype).itemsize)


def _choose_group(S: int, D: int) -> int:
    """Smallest G dividing S such that the flattened last dim G*D is a 128-multiple."""
    if D % 128 == 0:
        return 1
    for g in range(1, S + 1):
        if S % g == 0 and (g * D) % 128 == 0:
            return g
    return 1  # no lane-dense grouping exists; fall back to last dim = D


def _largest_multiple_divisor(n: int, limit: int, multiple: int):
    """Largest divisor of n that is a multiple of `multiple` and <= limit (or None)."""
    best = None
    d = multiple
    cap = min(n, limit)
    while d <= cap:
        if n % d == 0:
            best = d
        d += multiple
    return best


def _vmem_budget():
    """(per-buffer tile budget bytes, vmem_limit_bytes) keyed off the chip."""
    try:
        cap = pltpu.get_tpu_info().vmem_capacity_bytes
    except Exception:  # pragma: no cover - unknown chip / mock: be conservative
        cap = 64 * 1024 * 1024
    if cap >= 100 * 1024 * 1024:                     # v5e / v6e: 128 MiB VMEM
        return 4 * 1024 * 1024, 64 * 1024 * 1024
    return 2 * 1024 * 1024, 32 * 1024 * 1024         # v7x: 64 MiB VMEM


def _choose_tiles(P: int, C: int, itemsize: int, budget_bytes: int, sub: int, batch: int):
    budget_elems = max(sub * 128, budget_bytes // itemsize)

    # Column (lane) tile: full width unless that blows the budget; shrink to a
    # 128-multiple (divisor preferred, ragged fallback otherwise).
    if C % 128 != 0 or C * sub <= budget_elems:
        TC = C
    else:
        limit_c = budget_elems // sub
        TC = (_largest_multiple_divisor(C, limit_c, 128)
              or max(128, (limit_c // 128) * 128))
        TC = min(TC, C)

    # Row (sublane) tile: largest sublane-aligned size <= P within budget;
    # divisor preferred, ragged fallback otherwise (pl.cdiv grid + masking).
    row_limit = max(1, budget_elems // TC)
    if P <= row_limit:
        TP = P
    else:
        TP = (_largest_multiple_divisor(P, row_limit, sub)
              or max(sub, (row_limit // sub) * sub))
        TP = min(TP, P)

    # v7x has two TensorCores: ensure >1 grid step on a parallel axis if we can.
    if batch == 1 and TC == C and TP == P and P >= 2 * sub:
        half = _largest_multiple_divisor(P, P // 2, sub)
        if half is not None:
            TP = half

    return TP, TC


# --------------------------------------------------------------------------- #
# Forward wrapper
# --------------------------------------------------------------------------- #
def positional_encoding_forward(x: jnp.ndarray, pe_table: jnp.ndarray,
                                *, use_pallas=None, donate_x: bool = False) -> jnp.ndarray:
    """x: (B, S, D); pe_table: (max_len, D). Returns x + pe[:S] broadcast over batch."""
    B, S, D = x.shape
    max_len, d_model = pe_table.shape
    if S > max_len:
        raise ValueError(f"sequence length {S} exceeds max_len {max_len}")
    if d_model != D:
        raise ValueError(f"d_model mismatch: x has {D}, pe_table has {d_model}")

    pe_slice = pe_table[:S]                       # (S, D), f32; no per-call cast/tile

    # Small-input fast path: per-call Pallas overhead dominates tiny shapes.
    nbytes = B * S * D * jnp.dtype(x.dtype).itemsize
    if use_pallas is None:
        use_pallas = nbytes >= 256 * 1024
    if not use_pallas:
        return (x.astype(jnp.float32) + pe_slice[None]).astype(x.dtype)

    # Lane-dense view: group G consecutive positions per row so the last dim is
    # a 128-multiple whenever possible (unmasked vst stores).
    G = _choose_group(S, D)
    P = S // G                                    # pe period in rows
    C = G * D                                     # lane (last) dim

    x3 = x.reshape(B, P, C)                       # contiguous reshape (free)
    pe2 = pe_slice.reshape(P, C)

    itemsize = max(jnp.dtype(x.dtype).itemsize, 4)  # pe buffers are f32
    budget, vmem_limit = _vmem_budget()
    sub = _sublane(x.dtype)
    TP, TC = _choose_tiles(P, C, itemsize, budget, sub, B)

    # Grid order: (column tile, row tile, batch) with batch INNERMOST so pe's
    # block index (p, j) is constant across consecutive steps -> its DMA is
    # skipped and pe stays resident in VMEM (read once total from HBM).
    grid = (pl.cdiv(C, TC), pl.cdiv(P, TP), B)

    out3 = pl.pallas_call(
        _pe_add_kernel,
        out_shape=jax.ShapeDtypeStruct((B, P, C), x.dtype),
        grid_spec=pltpu.PrefetchScalarGridSpec(
            num_scalar_prefetch=0,
            grid=grid,
            in_specs=[
                pl.BlockSpec((1, TP, TC), lambda j, p, b: (b, p, j)),   # x tile
                pl.BlockSpec((TP, TC), lambda j, p, b: (p, j)),         # pe (batch-invariant)
            ],
            out_specs=pl.BlockSpec((1, TP, TC), lambda j, p, b: (b, p, j)),
        ),
        compiler_params=pltpu.CompilerParams(
            dimension_semantics=("parallel", "parallel", "parallel"),
            vmem_limit_bytes=vmem_limit,
        ),
        input_output_aliases=({0: 0} if donate_x else {}),
    )(x3, pe2)

    return out3.reshape(B, S, D)


# --------------------------------------------------------------------------- #
# Test
# --------------------------------------------------------------------------- #
if __name__ == "__main__":
    key = jax.random.PRNGKey(0)

    # Small shape from the module spec: batch=2, seq=8, d_model=32.
    B, S, D = 2, 8, 32
    x = jax.random.normal(key, (B, S, D), dtype=jnp.float32)
    pe_table = make_pe_table(d_model=D, max_len=512)

    out = positional_encoding_forward(x, pe_table, use_pallas=True)  # force kernel path
    out = jax.block_until_ready(out)
    ref = x + pe_table[None, :S, :]
    assert out.shape == (B, S, D)
    assert jnp.allclose(out, ref, atol=1e-6), "small-shape mismatch vs reference"

    # Slightly larger shape exercises the auto heuristic (also Pallas path).
    B2, S2, D2 = 4, 96, 256
    x2 = jax.random.normal(jax.random.PRNGKey(1), (B2, S2, D2), dtype=jnp.float32)
    pe_table2 = make_pe_table(d_model=D2, max_len=512)
    out2 = jax.block_until_ready(positional_encoding_forward(x2, pe_table2))
    ref2 = x2 + pe_table2[None, :S2, :]
    assert jnp.allclose(out2, ref2, atol=1e-6), "medium-shape mismatch vs reference"

    print("KERNEL_OK")
</pallas_src>

<mosaic_0001>
module attributes {stable_mosaic.version = 11 : i64} {
  func.func @_pe_add_kernel(%arg0: i32, %arg1: i32, %arg2: i32, %arg3: memref<1x2x128xf32, #tpu.memory_space<vmem>>, %arg4: memref<2x128xf32, #tpu.memory_space<vmem>>, %arg5: memref<1x2x128xf32, #tpu.memory_space<vmem>>) attributes {dimension_semantics = [#tpu.dimension_semantics<parallel>, #tpu.dimension_semantics<parallel>, #tpu.dimension_semantics<parallel>], iteration_bounds = array<i64: 1, 1, 2>, scalar_prefetch = 0 : i64, scratch_operands = 0 : i64, tpu.core_type = #tpu.core_type<tc>, window_params = [{transform_indices = @transform_0, window_bounds = array<i64: 1, 2, 128>}, {transform_indices = @transform_1, window_bounds = array<i64: 2, 128>}, {transform_indices = @transform_2, window_bounds = array<i64: 1, 2, 128>}]} {
    %c0 = arith.constant 0 : index
    %c0_0 = arith.constant 0 : index
    %c0_1 = arith.constant 0 : index
    %0 = vector.load %arg3[%c0, %c0_0, %c0_1] : memref<1x2x128xf32, #tpu.memory_space<vmem>>, vector<1x2x128xf32>
    %c0_2 = arith.constant 0 : index
    %c0_3 = arith.constant 0 : index
    %1 = vector.load %arg4[%c0_2, %c0_3] : memref<2x128xf32, #tpu.memory_space<vmem>>, vector<2x128xf32>
    %2 = vector.shape_cast %1 : vector<2x128xf32> to vector<1x2x128xf32>
    %3 = arith.addf %0, %2 : vector<1x2x128xf32>
    %c0_4 = arith.constant 0 : index
    %c0_5 = arith.constant 0 : index
    %c0_6 = arith.constant 0 : index
    %4 = vector.load %arg5[%c0_4, %c0_5, %c0_6] : memref<1x2x128xf32, #tpu.memory_space<vmem>>, vector<1x2x128xf32>
    tpu.vector_store %arg5[%c0_4, %c0_5, %c0_6], %3 {strides = array<i32>} : memref<1x2x128xf32, #tpu.memory_space<vmem>>, vector<1x2x128xf32>,
    return
  }
  func.func @transform_0(%arg0: i32, %arg1: i32, %arg2: i32) -> (i32, i32, i32) {
    %c0_i32 = arith.constant 0 : i32
    return %arg2, %arg1, %arg0 : i32, i32, i32
  }
  func.func @transform_1(%arg0: i32, %arg1: i32, %arg2: i32) -> (i32, i32) {
    %c0_i32 = arith.constant 0 : i32
    return %arg1, %arg0 : i32, i32
  }
  func.func @transform_2(%arg0: i32, %arg1: i32, %arg2: i32) -> (i32, i32, i32) {
    %c0_i32 = arith.constant 0 : i32
    return %arg2, %arg1, %arg0 : i32, i32, i32
  }
}

</mosaic_0001>

<llo_original>
// kernel: tpu_custom_call.1
$region0: #{tpu_custom_call.1}
  #allocation0 [shape = 'u32[]', space=smem, size = 0x4, offset = 0x4, fixed_abs, tag = 'smem constant byte address 0x4 - core index']
  #allocation1 [shape = 'u32[144,128]{1,0:T(1,128)}', space=vmem, size = 0x12000, scoped, tag = 'internal scratch']
  %s0 = inlined_call_operand.hbm [shape: f32[2,2,128], index: 0, kind: input, shape index: {}]
  %s1 = inlined_call_operand.vmem [shape: f32[2,128], index: 1, kind: input, shape index: {}]
  %s2 = inlined_call_operand.hbm [shape: f32[2,2,128], index: 2, kind: output, shape index: {}]
  %s3 = sld [smem:[#allocation0]]
  $region45: #{tpu_custom_call.1} parent=0
    _
  %s5 = ssub.s32 1, %s3
  %s6 = scalar_select 0, %s5, %s3
  $region1: #{tpu_custom_call.1} parent=0
    #allocation2 [shape = 'u8[2048]{0}', space=vmem, size = 0x800, scoped, tag = 'input window, operand 0']
    #allocation3 [shape = 's32[2]{0}', space=sflag, size = 0x8, scoped, tag = 'scoped memory for tpu_custom_call.1']
    #allocation4 [shape = 's32[2]{0}', space=sflag, size = 0x8, scoped, tag = 'scoped memory for tpu_custom_call.1']
    #allocation5 [shape = 'u8[2048]{0}', space=vmem, size = 0x800, scoped, tag = 'output window, operand 0']
    %7 = vsyncpa [#allocation3], 0
    %s8 = scalar_lea.sflag [#allocation3], 1
    %9 = vsyncpa %s8, 0
    %10 = vsyncpa [#allocation4], 0
    %s11 = scalar_lea.sflag [#allocation4], 1
    %12 = vsyncpa %s11, 0
    loop: start=0, step=1, limit=4
    $region2: #{tpu_custom_call.1} parent=1 // loop_pre_header
      _
    $region3: #{tpu_custom_call.1} parent=1 // loop_header
      %s14 = sphi 0, %s18
      %p15 = scmp.ge.s32.totalorder %s14, 4
      %s21 = sphi 0, %s40
      %s22 = sphi 0, %s36
      %s23 = sphi 0, %s32
      %s24 = sphi 0, %s21
      %s25 = sphi 0, %s22
      %s26 = sphi 0, %s23
      %s27 = sphi 0, %s24
      %s28 = sphi 0, %s25
      %s29 = sphi 0, %s26
      %s47 = sphi 0, %s49
      %s50 = sphi 0, %s47
      %s51 = sphi 0, %s50
      %s67 = sphi 0, %s51
      %s75 = sphi 0, %s77
      %s78 = sphi 0, %s75
      %s79 = sphi 0, %s78
      %s95 = sphi 0, %s79
      %s105 = sphi 0, %s107
      %s108 = sphi 0, %s105
      %s109 = sphi 0, %s108
      %s125 = sphi 0, %s109
    $region4: #{tpu_custom_call.1} parent=1 // loop_header_branch
      %17 = sbr.rel (%p15) target = $region8
    $region5: #{tpu_custom_call.1} parent=1 // loop_body
      %s19 = ssub.s32 %s14, 1
      %s20 = ssub.s32 %s14, 2
      %s30 = sadd.s32 1, %s23
      %p31 = scmp.ge.s32.totalorder %s30, 2
      %s32 = scalar_select %p31, 0, %s30
      %s33 = sadd.s32 1, %s22
      %s34 = scalar_select %p31, %s33, %s22
      %p35 = scmp.ge.s32.totalorder %s34, 1
      %s36 = scalar_select %p35, 0, %s34
      %s37 = sadd.s32 1, %s21
      %s38 = scalar_select %p35, %s37, %s21
      %p39 = scmp.ge.s32.totalorder %s38, 1
      %s40 = scalar_select %p39, 0, %s38
      %s41 = ssub.s32 %s23, %s32
      %s42 = ssub.s32 %s22, %s36
      %s43 = sor.u32 %s41, %s42
      %s44 = ssub.s32 %s21, %s40
      %s45 = sor.u32 %s43, %s44
      %p46 = scmp.eq.s32.totalorder %s45, 0
      %s48 = sadd.s32 %s47, 1
      %s49 = scalar_select %p46, %s47, %s48
      %p52 = pneg %p46
      %p53 = scmp.eq.s32.totalorder %s14, 1
      %p54 = por %p52, %p53
      %p55 = scmp.ne.s32.totalorder %s47, %s50
      %p56 = scmp.eq.s32.totalorder %s14, 0
      %p57 = por %p55, %p56
      %p58 = scmp.ne.s32.totalorder %s47, %s50
      %p59 = scmp.eq.s32.totalorder %s19, 1
      %p60 = por %p58, %p59
      %p61 = scmp.ne.s32.totalorder %s50, %s51
      %p62 = scmp.eq.s32.totalorder %s19, 0
      %p63 = por %p61, %p62
      %p64 = scmp.ne.s32.totalorder %s50, %s51
      %p65 = scmp.eq.s32.totalorder %s20, 1
      %p66 = por %p64, %p65
      %p68 = scmp.ne.s32.totalorder %s51, %s67
      %p69 = scmp.eq.s32.totalorder %s20, 0
      %p70 = por %p68, %p69
      %s71 = ssub.s32 %s22, %s36
      %s72 = ssub.s32 %s21, %s40
      %s73 = sor.u32 %s71, %s72
      %p74 = scmp.eq.s32.totalorder %s73, 0
      %s76 = sadd.s32 %s75, 1
      %s77 = scalar_select %p74, %s75, %s76
      %p80 = pneg %p74
      %p81 = scmp.eq.s32.totalorder %s14, 1
      %p82 = por %p80, %p81
      %p83 = scmp.ne.s32.totalorder %s75, %s78
      %p84 = scmp.eq.s32.totalorder %s14, 0
      %p85 = por %p83, %p84
      %p86 = scmp.ne.s32.totalorder %s75, %s78
      %p87 = scmp.eq.s32.totalorder %s19, 1
      %p88 = por %p86, %p87
      %p89 = scmp.ne.s32.totalorder %s78, %s79
      %p90 = scmp.eq.s32.totalorder %s19, 0
      %p91 = por %p89, %p90
      %p92 = scmp.ne.s32.totalorder %s78, %s79
      %p93 = scmp.eq.s32.totalorder %s20, 1
      %p94 = por %p92, %p93
      %p96 = scmp.ne.s32.totalorder %s79, %s95
      %p97 = scmp.eq.s32.totalorder %s20, 0
      %p98 = por %p96, %p97
      %s99 = ssub.s32 %s23, %s32
      %s100 = ssub.s32 %s22, %s36
      %s101 = sor.u32 %s99, %s100
      %s102 = ssub.s32 %s21, %s40
      %s103 = sor.u32 %s101, %s102
      %p104 = scmp.eq.s32.totalorder %s103, 0
      %s106 = sadd.s32 %s105, 1
      %s107 = scalar_select %p104, %s105, %s106
      %p110 = pneg %p104
      %p111 = scmp.eq.s32.totalorder %s14, 1
      %p112 = por %p110, %p111
      %p113 = scmp.ne.s32.totalorder %s105, %s108
      %p114 = scmp.eq.s32.totalorder %s14, 0
      %p115 = por %p113, %p114
      %p116 = scmp.ne.s32.totalorder %s105, %s108
      %p117 = scmp.eq.s32.totalorder %s19, 1
      %p118 = por %p116, %p117
      %p119 = scmp.ne.s32.totalorder %s108, %s109
      %p120 = scmp.eq.s32.totalorder %s19, 0
      %p121 = por %p119, %p120
      %p122 = scmp.ne.s32.totalorder %s108, %s109
      %p123 = scmp.eq.s32.totalorder %s20, 1
      %p124 = por %p122, %p123
      %p126 = scmp.ne.s32.totalorder %s109, %s125
      %p127 = scmp.eq.s32.totalorder %s20, 0
      %p128 = por %p126, %p127
      %p129 = scmp.le.s32.totalorder 1, %s14
      %p130 = scmp.lt.s32.totalorder %s14, 3
      %p131 = pnand %p129, %p130
      %p132 = pneg %p131
      // Predicated region
      $region9: #{tpu_custom_call.1} parent=5 // pred_check
        _
      $region10: #{tpu_custom_call.1} parent=5 // pred_check_branch
        %134 = sbr.rel (%p131) target = $region12
      $region11: #{tpu_custom_call.1} parent=5 // pred_region
        %s135 = ssub.s32 %s14, 1
        // Predicated region
        $region13: #{tpu_custom_call.1} parent=11 // pred_check
          %p136 = pneg %p91
        $region14: #{tpu_custom_call.1} parent=11 // pred_check_branch
          %138 = sbr.rel (%p136) target = $region16
        $region15: #{tpu_custom_call.1} parent=11 // pred_region
          %p139 = scmp.lt.s32.totalorder %s25, 0
          %s140 = scalar_select %p139, %s25, 0
          %p141 = scmp.lt.s32.totalorder %s24, 0
          %s142 = scalar_select %p141, %s24, 0
          %s143 = sadd.s32 %s142, %s140
          %s144 = smul.addr %s143, 2
          %s145 = scalar_lea.vmem %s1, %s144
        $region16: #{tpu_custom_call.1} parent=11 // pred_fallthru
          _
      $region12: #{tpu_custom_call.1} parent=5 // pred_fallthru
        _
      %p146 = scmp.lt.s32.totalorder %s14, 2
      // Predicated region
      $region17: #{tpu_custom_call.1} parent=5 // pred_check
        %p147 = pneg %p146
      $region18: #{tpu_custom_call.1} parent=5 // pred_check_branch
        %149 = sbr.rel (%p147) target = $region20
      $region19: #{tpu_custom_call.1} parent=5 // pred_region
        // Predicated region
        $region21: #{tpu_custom_call.1} parent=19 // pred_check
          %p150 = pneg %p57
        $region22: #{tpu_custom_call.1} parent=19 // pred_check_branch
          %152 = sbr.rel (%p150) target = $region24
        $region23: #{tpu_custom_call.1} parent=19 // pred_region
          %s153 = sand.u32 %s47, 1
          %s154 = scalar_lea.sflag [#allocation3], %s153
          %s155 = sand.u32 %s47, 1
          %s156 = smul.addr %s155, 2
          %s157 = scalar_lea.vmem [#allocation2], %s156
          %s159 = ssub.s32 32, 32
          %160 = vsyncadd %s154, %s159
          %s161 = sadd.s32 %s21, %s22
          %s162 = sadd.s32 %s161, %s23
          %s163 = smul.addr %s162, 32
          %s164 = scalar_lea.hbm %s0, %s163
          %s166 = sshll.u32 %s157, 4
          %s167 = int_to_ptr.vmem [resolvable:$true] %s166
          %169 = dma.hbm_to_vmem [thread:$0]  %s164, 32, %s167, %s154
        $region24: #{tpu_custom_call.1} parent=19 // pred_fallthru
          _
      $region20: #{tpu_custom_call.1} parent=5 // pred_fallthru
        _
      %p170 = scmp.le.s32.totalorder 1, %s14
      %p171 = scmp.lt.s32.totalorder %s14, 3
      %p172 = pnand %p170, %p171
      %p173 = pneg %p172
      // Predicated region
      $region25: #{tpu_custom_call.1} parent=5 // pred_check
        _
      $region26: #{tpu_custom_call.1} parent=5 // pred_check_branch
        %175 = sbr.rel (%p172) target = $region28
      $region27: #{tpu_custom_call.1} parent=5 // pred_region
        %s176 = ssub.s32 %s14, 1
        %s177 = sand.u32 %s50, 1
        %s178 = scalar_lea.sflag [#allocation3], %s177
        %s179 = sand.u32 %s50, 1
        %s180 = smul.addr %s179, 2
        %s181 = scalar_lea.vmem [#allocation2], %s180
        // Predicated region
        $region29: #{tpu_custom_call.1} parent=27 // pred_check
          %p182 = pneg %p63
        $region30: #{tpu_custom_call.1} parent=27 // pred_check_branch
          %184 = sbr.rel (%p182) target = $region32
        $region31: #{tpu_custom_call.1} parent=27 // pred_region
          %185 = dma.done %s178, 32
        $region32: #{tpu_custom_call.1} parent=27 // pred_fallthru
          _
        %s186 = sand.u32 %s50, 1
        %s187 = scalar_lea.sflag [#allocation3], %s186
        %s188 = sand.u32 %s50, 1
        %s189 = smul.addr %s188, 2
        %s190 = scalar_lea.vmem [#allocation2], %s189
        %p191 = pneg %p63
        %p192 = pneg %p60
        %p193 = scmp.lt.s32.totalorder %s25, 0
        %s194 = scalar_select %p193, %s25, 0
        %p195 = scmp.lt.s32.totalorder %s24, 0
        %s196 = scalar_select %p195, %s24, 0
        %s197 = sadd.s32 %s196, %s194
        %s198 = smul.addr %s197, 2
        %s199 = scalar_lea.vmem %s1, %s198
        %p200 = pneg %p91
        %p201 = pneg %p88
        %p202 = pneg %p121
        %p203 = pneg %p118
        %s204 = sand.u32 %s108, 1
        %s205 = scalar_lea.sflag [#allocation4], %s204
        %s206 = sand.u32 %s108, 1
        %s207 = smul.addr %s206, 2
        %s208 = scalar_lea.vmem [#allocation5], %s207
        %p209 = scmp.lt.s32.totalorder %s25, 0
        %s210 = scalar_select %p209, %s25, 0
        %p211 = scmp.lt.s32.totalorder %s24, 0
        %s212 = scalar_select %p211, %s24, 0
        %s213 = sadd.s32 %s212, %s210
        %s214 = smul.addr %s213, 2
        %s215 = scalar_lea.vmem %s1, %s214
        %v216 = vld [vmem:[%s181] sm:$0x3]
        %v217 = vld [vmem:[%s215] sm:$0x3]
        %v218 = vadd.f32 %v216, %v217
        %219 = vst [vmem:[%s208] sm:$0x3] %v218
        %s220 = sand.u32 %s108, 1
        %s221 = scalar_lea.sflag [#allocation4], %s220
        %s222 = sand.u32 %s108, 1
        %s223 = smul.addr %s222, 2
        %s224 = scalar_lea.vmem [#allocation5], %s223
        // Predicated region
        $region33: #{tpu_custom_call.1} parent=27 // pred_check
          %p225 = pneg %p118
        $region34: #{tpu_custom_call.1} parent=27 // pred_check_branch
          %227 = sbr.rel (%p225) target = $region36
        $region35: #{tpu_custom_call.1} parent=27 // pred_region
          %s229 = ssub.s32 32, 32
          %230 = vsyncadd %s221, %s229
          %s231 = sadd.s32 %s24, %s25
          %s232 = sadd.s32 %s231, %s26
          %s233 = smul.addr %s232, 32
          %s234 = scalar_lea.hbm %s2, %s233
          %s236 = sshll.u32 %s224, 4
          %s237 = int_to_ptr.vmem [resolvable:$true] %s236
          %239 = dma.vmem_to_hbm [thread:$0]  %s237, 32, %s234, %s221
        $region36: #{tpu_custom_call.1} parent=27 // pred_fallthru
          _
      $region28: #{tpu_custom_call.1} parent=5 // pred_fallthru
        _
      %p240 = scmp.le.s32.totalorder 2, %s14
      // Predicated region
      $region37: #{tpu_custom_call.1} parent=5 // pred_check
        %p241 = pneg %p240
      $region38: #{tpu_custom_call.1} parent=5 // pred_check_branch
        %243 = sbr.rel (%p241) target = $region40
      $region39: #{tpu_custom_call.1} parent=5 // pred_region
        %s244 = ssub.s32 %s14, 2
        // Predicated region
        $region41: #{tpu_custom_call.1} parent=39 // pred_check
          %p245 = pneg %p124
        $region42: #{tpu_custom_call.1} parent=39 // pred_check_branch
          %247 = sbr.rel (%p245) target = $region44
        $region43: #{tpu_custom_call.1} parent=39 // pred_region
          %s248 = sand.u32 %s109, 1
          %s249 = scalar_lea.sflag [#allocation4], %s248
          %s250 = sand.u32 %s109, 1
          %s251 = smul.addr %s250, 2
          %s252 = scalar_lea.vmem [#allocation5], %s251
          %253 = dma.done %s249, 32
        $region44: #{tpu_custom_call.1} parent=39 // pred_fallthru
          _
      $region40: #{tpu_custom_call.1} parent=5 // pred_fallthru
        _
    $region6: #{tpu_custom_call.1} parent=1 // loop_footer
      %s18 = sadd.s32 1, %s14
    $region7: #{tpu_custom_call.1} parent=1 // loop_footer_branch
      %13 = sbr.rel target = $region3
    $region8: #{tpu_custom_call.1} parent=1 // loop_exit
      _
    %254 = vsyncpa [#allocation3], 1
    %s255 = scalar_lea.sflag [#allocation3], 1
    %256 = vsyncpa %s255, 1
    %257 = vsyncpa [#allocation4], 1
    %s258 = scalar_lea.sflag [#allocation4], 1
    %259 = vsyncpa %s258, 1

</llo_original>
